<compile_context>
chip_gen: v5e
topology: v5e:2x2
jax: 0.10.0
libtpu: 0.0.40
codegen_flags: <defaults>
</compile_context>

<pallas_src>
import jax
import jax.numpy as jnp
from jax import lax
from jax.experimental import pallas as pl
from jax.experimental.pallas import tpu as pltpu

HIDDEN = 128
LANES = 128


def mlp_head_kernel(x_ref, w1_ref, b1_ref, wd_ref, bd_ref, o_ref):
    # x_ref:  (4, TB)    batch-on-lanes input tile (VMEM)
    # w1_ref: (128, 4)   first-layer weight (out, in) (VMEM, grid-resident)
    # b1_ref: (128, 1)   first-layer bias (lane broadcast)
    # wd_ref: (1, 128)   w2[1] - w2[0]  (folded 2-class head)
    # bd_ref: (1, 1)     b2[1] - b2[0]  (SMEM scalar)
    # o_ref:  (2, TB)    [P(class 0); P(class 1)]
    w1 = w1_ref[...]                       # (128, 4)
    b1 = b1_ref[...]                       # (128, 1)
    wd = wd_ref[...]                       # (1, 128)
    bd = bd_ref[0, 0]                      # scalar

    tb = x_ref.shape[1]
    # Lane-chunk the tile so the (128, chunk) hidden lives entirely in vregs
    # (no VMEM round-trip of the full (128, TB) activation).
    chunk = 256 if tb % 256 == 0 else 128
    n_chunks = tb // chunk

    def body(c, carry):
        j = pl.multiple_of(c * chunk, chunk)
        xc = x_ref[:, pl.ds(j, chunk)]                                      # (4, chunk)

        # Linear(4,128) + ReLU  ->  (128, chunk)
        h = jnp.dot(w1, xc, preferred_element_type=jnp.float32) + b1
        h = jnp.maximum(h, 0.0)

        # Folded 2-class head: logit difference d = (w2[1]-w2[0]) @ h + (b2[1]-b2[0])
        d = jnp.dot(wd, h, preferred_element_type=jnp.float32) + bd         # (1, chunk)

        # softmax over 2 classes == [sigmoid(-d), sigmoid(d)]; exp + reciprocal on EUP.
        p1 = pl.reciprocal(1.0 + jnp.exp(-d), approx=False)
        p0 = pl.reciprocal(1.0 + jnp.exp(d), approx=False)

        # Single fused (2, chunk) store for both probability rows.
        o_ref[:, pl.ds(j, chunk)] = jnp.concatenate([p0, p1], axis=0).astype(o_ref.dtype)
        return carry

    lax.fori_loop(0, n_chunks, body, 0, unroll=True)


def _round_up(n, m):
    return ((n + m - 1) // m) * m


def _pick_tiling(batch, tb_max):
    assert tb_max % LANES == 0 and tb_max >= LANES
    b_min = _round_up(max(batch, 1), LANES)
    if b_min <= LANES:
        tb = LANES                                   # single tiny tile
    else:
        # Aim for >= 2 balanced tiles so both v7x TensorCores get work
        # (harmless on v5e/v6e), capped at tb_max to bound per-step VMEM.
        tb = min(tb_max, _round_up((b_min + 1) // 2, LANES))
    b_pad = _round_up(b_min, tb)
    return tb, b_pad


def cartpole_ai_forward_lanes(x_t, w1, b1, w2, b2, *, tb_max=4096):
    """Lane-native forward pass.

    x_t: (4, B) float32 observations (batch on lanes)  ->  (2, B) probabilities.
    Preferred entry point inside an RL loop: no transpose is needed on either
    side of the kernel (only a cheap lane pad when B is not a multiple of 128).
    """
    assert x_t.shape[0] == 4
    batch = x_t.shape[1]
    tb, b_pad = _pick_tiling(batch, tb_max)

    x_pad = x_t.astype(jnp.float32)
    if b_pad != batch:
        x_pad = jnp.pad(x_pad, ((0, 0), (0, b_pad - batch)))

    b1_c = b1.reshape(HIDDEN, 1).astype(jnp.float32)
    # Fold the 2-class head into one row + one scalar (sigmoid trick).
    w_diff = (w2[1] - w2[0]).reshape(1, HIDDEN).astype(jnp.float32)
    b_diff = (b2[1] - b2[0]).reshape(1, 1).astype(jnp.float32)

    weight_bytes = (HIDDEN * 4 + HIDDEN + HIDDEN + 1) * 4
    cost = pl.CostEstimate(
        flops=2 * b_pad * (4 * HIDDEN + HIDDEN),
        transcendentals=2 * b_pad,
        bytes_accessed=b_pad * (4 + 2) * 4 + weight_bytes,
    )

    grid = (b_pad // tb,)
    out_t = pl.pallas_call(
        mlp_head_kernel,
        out_shape=jax.ShapeDtypeStruct((2, b_pad), jnp.float32),
        grid_spec=pltpu.PrefetchScalarGridSpec(
            num_scalar_prefetch=0,
            grid=grid,
            in_specs=[
                # x: batch-tiled along the lane axis (double-buffered by Pallas)
                pl.BlockSpec((4, tb), lambda i: (0, i)),
                # weights / biases: constant blocks, VMEM-resident across the grid
                pl.BlockSpec((HIDDEN, 4), lambda i: (0, 0)),
                pl.BlockSpec((HIDDEN, 1), lambda i: (0, 0)),
                pl.BlockSpec((1, HIDDEN), lambda i: (0, 0)),
                # scalar head-bias difference lives in SMEM (no padded VMEM tile)
                pl.BlockSpec(memory_space=pltpu.MemorySpace.SMEM),
            ],
            out_specs=pl.BlockSpec((2, tb), lambda i: (0, i)),
        ),
        compiler_params=pltpu.CompilerParams(
            # independent batch tiles -> shard across v7x's 2 TensorCores
            dimension_semantics=("parallel",),
            # let XLA fuse the (B,4)->(4,B_pad) transpose/pad producer into the
            # Pallas input instead of materializing it in HBM
            allow_input_fusion=[True, False, False, False, False],
        ),
        cost_estimate=cost,
    )(x_pad, w1.astype(jnp.float32), b1_c, w_diff, b_diff)

    return out_t[:, :batch]  # (2, B)


def cartpole_ai_forward(x, w1, b1, w2, b2, *, tb_max=4096):
    """PyTorch-layout forward pass: x (B, 4) -> (B, 2) softmax probabilities.

    Thin layout adapter around the lane-native kernel; the x transpose/pad is
    fused into the Pallas input via allow_input_fusion, and the epilogue only
    touches the tiny (2, B) probability array.
    """
    probs_t = cartpole_ai_forward_lanes(
        x.astype(jnp.float32).T, w1, b1, w2, b2, tb_max=tb_max
    )
    return probs_t.T  # (B, 2)


def init_params(key):
    # Deterministic init mimicking nn.Linear default: U(-1/sqrt(fan_in), ...),
    # stored in PyTorch's (out_features, in_features) layout.
    k1, k2, k3, k4 = jax.random.split(key, 4)
    bound1 = 1.0 / jnp.sqrt(4.0)
    bound2 = 1.0 / jnp.sqrt(128.0)
    w1 = jax.random.uniform(k1, (HIDDEN, 4), jnp.float32, -bound1, bound1)
    b1 = jax.random.uniform(k2, (HIDDEN,), jnp.float32, -bound1, bound1)
    w2 = jax.random.uniform(k3, (2, HIDDEN), jnp.float32, -bound2, bound2)
    b2 = jax.random.uniform(k4, (2,), jnp.float32, -bound2, bound2)
    return w1, b1, w2, b2


def reference_forward(x, w1, b1, w2, b2):
    # Pure-JAX reference, same math as the PyTorch module.
    h = jnp.maximum(x @ w1.T + b1, 0.0)
    return jax.nn.softmax(h @ w2.T + b2, axis=1)


if __name__ == "__main__":
    key = jax.random.PRNGKey(0)
    k_params, k_x1, k_x2 = jax.random.split(key, 3)
    w1, b1, w2, b2 = init_params(k_params)

    # CartPole observation: 4 features per example.
    #  B=8   -> single 128-lane tile, 1 grid step.
    #  B=300 -> pads to 512 with tb=256: 2 grid steps (v7x dual-TC path) and the
    #           in-kernel 256-lane chunk loop.
    for B, kx in ((8, k_x1), (300, k_x2)):
        x = jax.random.normal(kx, (B, 4), jnp.float32)
        out = jax.block_until_ready(cartpole_ai_forward(x, w1, b1, w2, b2))

        ref = reference_forward(x, w1, b1, w2, b2)
        assert out.shape == (B, 2)
        assert jnp.allclose(out, ref, atol=1e-5, rtol=1e-5)
        assert jnp.allclose(jnp.sum(out, axis=1), 1.0, atol=1e-5)

    # Lane-native entry point (no transposes at all around the kernel).
    xB = jax.random.normal(k_x2, (4, 16), jnp.float32)
    out_lanes = jax.block_until_ready(cartpole_ai_forward_lanes(xB, w1, b1, w2, b2))
    ref_lanes = reference_forward(xB.T, w1, b1, w2, b2).T
    assert out_lanes.shape == (2, 16)
    assert jnp.allclose(out_lanes, ref_lanes, atol=1e-5, rtol=1e-5)

    print("KERNEL_OK")
</pallas_src>

<mosaic_0001>
module attributes {stable_mosaic.version = 11 : i64} {
  func.func @mlp_head_kernel(%arg0: i32, %arg1: memref<4x128xf32, #tpu.memory_space<vmem>>, %arg2: memref<128x4xf32, #tpu.memory_space<vmem>>, %arg3: memref<128x1xf32, #tpu.memory_space<vmem>>, %arg4: memref<1x128xf32, #tpu.memory_space<vmem>>, %arg5: memref<1x1xf32, #tpu.memory_space<smem>>, %arg6: memref<2x128xf32, #tpu.memory_space<vmem>>) attributes {dimension_semantics = [#tpu.dimension_semantics<parallel>], iteration_bounds = array<i64: 1>, scalar_prefetch = 0 : i64, scratch_operands = 0 : i64, tpu.core_type = #tpu.core_type<tc>, window_params = [{transform_indices = @transform_0, window_bounds = array<i64: 4, 128>}, {pipeline_mode = #tpu.pipeline_mode<synchronous>, transform_indices = @transform_1, window_bounds = array<i64: 128, 4>}, {pipeline_mode = #tpu.pipeline_mode<synchronous>, transform_indices = @transform_2, window_bounds = array<i64: 128, 1>}, {pipeline_mode = #tpu.pipeline_mode<synchronous>, transform_indices = @transform_3, window_bounds = array<i64: 1, 128>}, {transform_indices = @transform_4, window_bounds = array<i64: 1, 1>}, {transform_indices = @transform_5, window_bounds = array<i64: 2, 128>}]} {
    %c0 = arith.constant 0 : index
    %c0_0 = arith.constant 0 : index
    %0 = vector.load %arg2[%c0, %c0_0] : memref<128x4xf32, #tpu.memory_space<vmem>>, vector<128x4xf32>
    %c0_1 = arith.constant 0 : index
    %c0_2 = arith.constant 0 : index
    %1 = vector.load %arg3[%c0_1, %c0_2] : memref<128x1xf32, #tpu.memory_space<vmem>>, vector<128x1xf32>
    %c0_3 = arith.constant 0 : index
    %c0_4 = arith.constant 0 : index
    %2 = vector.load %arg4[%c0_3, %c0_4] : memref<1x128xf32, #tpu.memory_space<vmem>>, vector<1x128xf32>
    %c0_5 = arith.constant 0 : index
    %c0_6 = arith.constant 0 : index
    %3 = memref.load %arg5[%c0_5, %c0_6] : memref<1x1xf32, #tpu.memory_space<smem>>
    %c0_i32 = arith.constant 0 : i32
    %c128_i32 = arith.constant 128 : i32
    %4 = arith.muli %c0_i32, %c128_i32 : i32
    %5 = tpu.assume_multiple %4, 128 : i32
    %c0_7 = arith.constant 0 : index
    %6 = arith.index_cast %5 : i32 to index
    %7 = vector.load %arg1[%c0_7, %6] : memref<4x128xf32, #tpu.memory_space<vmem>>, vector<4x128xf32>
    %cst = arith.constant dense<0.000000e+00> : vector<128x128xf32>
    %8 = tpu.matmul %0, %7, %cst {dimension_numbers = #tpu.dot_dimension_numbers<[1], [0], [0], [1], [0, 0, 1, 1], [], []>} : vector<128x4xf32>, vector<4x128xf32>, vector<128x128xf32> -> vector<128x128xf32>
    %9 = vector.broadcast %1 : vector<128x1xf32> to vector<128x128xf32>
    %10 = arith.addf %8, %9 : vector<128x128xf32>
    %cst_8 = arith.constant 0.000000e+00 : f32
    %11 = vector.broadcast %cst_8 : f32 to vector<128x128xf32>
    %12 = arith.maximumf %10, %11 : vector<128x128xf32>
    %cst_9 = arith.constant dense<0.000000e+00> : vector<1x128xf32>
    %13 = tpu.matmul %2, %12, %cst_9 {dimension_numbers = #tpu.dot_dimension_numbers<[1], [0], [0], [1], [0, 0, 1, 1], [], []>} : vector<1x128xf32>, vector<128x128xf32>, vector<1x128xf32> -> vector<1x128xf32>
    %14 = vector.broadcast %3 : f32 to vector<1x128xf32>
    %15 = arith.addf %13, %14 : vector<1x128xf32>
    %cst_10 = arith.constant 0.000000e+00 : f32
    %16 = vector.broadcast %cst_10 : f32 to vector<1x128xf32>
    %17 = arith.subf %16, %15 : vector<1x128xf32>
    %18 = math.exp %17 : vector<1x128xf32>
    %cst_11 = arith.constant 1.000000e+00 : f32
    %19 = vector.broadcast %cst_11 : f32 to vector<1x128xf32>
    %20 = arith.addf %19, %18 : vector<1x128xf32>
    %21 = tpu.reciprocal %20 : vector<1x128xf32> -> vector<1x128xf32>
    %22 = math.exp %15 : vector<1x128xf32>
    %cst_12 = arith.constant 1.000000e+00 : f32
    %23 = vector.broadcast %cst_12 : f32 to vector<1x128xf32>
    %24 = arith.addf %23, %22 : vector<1x128xf32>
    %25 = tpu.reciprocal %24 : vector<1x128xf32> -> vector<1x128xf32>
    %26 = tpu.concatenate %25, %21 in 0 : vector<1x128xf32>, vector<1x128xf32> -> vector<2x128xf32>
    %c0_13 = arith.constant 0 : index
    %27 = arith.index_cast %5 : i32 to index
    %28 = vector.load %arg6[%c0_13, %27] : memref<2x128xf32, #tpu.memory_space<vmem>>, vector<2x128xf32>
    tpu.vector_store %arg6[%c0_13, %27], %26 {strides = array<i32>} : memref<2x128xf32, #tpu.memory_space<vmem>>, vector<2x128xf32>,
    %c1_i32 = arith.constant 1 : i32
    return
  }
  func.func @transform_0(%arg0: i32) -> (i32, i32) {
    %c0_i32 = arith.constant 0 : i32
    %c0_i32_0 = arith.constant 0 : i32
    return %c0_i32, %arg0 : i32, i32
  }
  func.func @transform_1(%arg0: i32) -> (i32, i32) {
    %c0_i32 = arith.constant 0 : i32
    %c0_i32_0 = arith.constant 0 : i32
    %c0_i32_1 = arith.constant 0 : i32
    return %c0_i32, %c0_i32_0 : i32, i32
  }
  func.func @transform_2(%arg0: i32) -> (i32, i32) {
    %c0_i32 = arith.constant 0 : i32
    %c0_i32_0 = arith.constant 0 : i32
    %c0_i32_1 = arith.constant 0 : i32
    return %c0_i32, %c0_i32_0 : i32, i32
  }
  func.func @transform_3(%arg0: i32) -> (i32, i32) {
    %c0_i32 = arith.constant 0 : i32
    %c0_i32_0 = arith.constant 0 : i32
    %c0_i32_1 = arith.constant 0 : i32
    return %c0_i32, %c0_i32_0 : i32, i32
  }
  func.func @transform_4(%arg0: i32) -> (i32, i32) {
    %c0_i32 = arith.constant 0 : i32
    %c0_i32_0 = arith.constant 0 : i32
    %c0_i32_1 = arith.constant 0 : i32
    return %c0_i32, %c0_i32_0 : i32, i32
  }
  func.func @transform_5(%arg0: i32) -> (i32, i32) {
    %c0_i32 = arith.constant 0 : i32
    %c0_i32_0 = arith.constant 0 : i32
    return %c0_i32, %arg0 : i32, i32
  }
}

</mosaic_0001>

<llo_original>
// kernel: tpu_custom_call.1
$region0: #{tpu_custom_call.1}
  #allocation0 [shape = 'u32[]', space=smem, size = 0x4, offset = 0x4, fixed_abs, tag = 'smem constant byte address 0x4 - core index']
  #allocation1 [shape = 'u32[72,128]{1,0:T(1,128)}', space=vmem, size = 0x9000, scoped, tag = 'internal scratch']
  #allocation2 [shape = 'f32[1,1]{1,0:T(1,128)S(6)}', space=smem, size = 0x200, scoped, tag = 'scoped memory for tpu_custom_call.1']
  %s0 = inlined_call_operand.vmem [shape: f32[4,128], index: 0, kind: input, shape index: {}]
  %s1 = inlined_call_operand.vmem [shape: f32[128,4], index: 1, kind: input, shape index: {}]
  %s2 = inlined_call_operand.vmem [shape: f32[128,1], index: 2, kind: input, shape index: {}]
  %s3 = inlined_call_operand.vmem [shape: f32[1,128], index: 3, kind: input, shape index: {}]
  %s4 = inlined_call_operand.<no memory space> [shape: f32[1,1], index: 4, kind: input, shape index: {}]
  %s5 = inlined_call_operand.hbm [shape: f32[2,128], index: 5, kind: output, shape index: {}]
  %s6 = sld [smem:[#allocation0]]
  $region30: #{tpu_custom_call.1} parent=0
    _
  %s8 = ssub.s32 1, %s6
  %s9 = scalar_select 0, %s8, %s6
  %10 = sst [smem:[#allocation2]] %s4
  $region1: #{tpu_custom_call.1} parent=0
    #allocation3 [shape = 'u8[1024]{0}', space=vmem, size = 0x400, scoped, tag = 'output window, operand 0, single buffered']
    #allocation4 [shape = 's32[1]{0}', space=sflag, size = 0x4, scoped, tag = 'scoped memory for tpu_custom_call.1']
    %11 = vsyncpa [#allocation4], 0
    // Predicated region
    $region2: #{tpu_custom_call.1} parent=1 // pred_check
      _
    $region3: #{tpu_custom_call.1} parent=1 // pred_check_branch
      %13 = sbr.rel (0) target = $region5
    $region4: #{tpu_custom_call.1} parent=1 // pred_region
      _
    $region5: #{tpu_custom_call.1} parent=1 // pred_fallthru
      _
    // Predicated region
    $region6: #{tpu_custom_call.1} parent=1 // pred_check
      _
    $region7: #{tpu_custom_call.1} parent=1 // pred_check_branch
      %15 = sbr.rel (0) target = $region9
    $region8: #{tpu_custom_call.1} parent=1 // pred_region
      _
    $region9: #{tpu_custom_call.1} parent=1 // pred_fallthru
      _
    // Predicated region
    $region10: #{tpu_custom_call.1} parent=1 // pred_check
      _
    $region11: #{tpu_custom_call.1} parent=1 // pred_check_branch
      %17 = sbr.rel (0) target = $region13
    $region12: #{tpu_custom_call.1} parent=1 // pred_region
      _
    $region13: #{tpu_custom_call.1} parent=1 // pred_fallthru
      _
    // Predicated region
    $region14: #{tpu_custom_call.1} parent=1 // pred_check
      _
    $region15: #{tpu_custom_call.1} parent=1 // pred_check_branch
      %19 = sbr.rel (0) target = $region17
    $region16: #{tpu_custom_call.1} parent=1 // pred_region
      _
    $region17: #{tpu_custom_call.1} parent=1 // pred_fallthru
      _
    // Predicated region
    $region18: #{tpu_custom_call.1} parent=1 // pred_check
      _
    $region19: #{tpu_custom_call.1} parent=1 // pred_check_branch
      %21 = sbr.rel (0) target = $region21
    $region20: #{tpu_custom_call.1} parent=1 // pred_region
      _
    $region21: #{tpu_custom_call.1} parent=1 // pred_fallthru
      _
    %v22 = vld [vmem:[%s1] sm:$0xff]
    %v23 = vld [vmem:[%s1 + $0x8] sm:$0xff]
    %v24 = vld [vmem:[%s1 + $0x10] sm:$0xff]
    %v25 = vld [vmem:[%s1 + $0x18] sm:$0xff]
    %v26 = vld [vmem:[%s1 + $0x20] sm:$0xff]
    %v27 = vld [vmem:[%s1 + $0x28] sm:$0xff]
    %v28 = vld [vmem:[%s1 + $0x30] sm:$0xff]
    %v29 = vld [vmem:[%s1 + $0x38] sm:$0xff]
    %v30 = vld [vmem:[%s1 + $0x40] sm:$0xff]
    %v31 = vld [vmem:[%s1 + $0x48] sm:$0xff]
    %v32 = vld [vmem:[%s1 + $0x50] sm:$0xff]
    %v33 = vld [vmem:[%s1 + $0x58] sm:$0xff]
    %v34 = vld [vmem:[%s1 + $0x60] sm:$0xff]
    %v35 = vld [vmem:[%s1 + $0x68] sm:$0xff]
    %v36 = vld [vmem:[%s1 + $0x70] sm:$0xff]
    %v37 = vld [vmem:[%s1 + $0x78] sm:$0xff]
    %v38 = vld [vmem:[%s2] sm:$0xff]
    %v39 = vld [vmem:[%s2 + $0x8] sm:$0xff]
    %v40 = vld [vmem:[%s2 + $0x10] sm:$0xff]
    %v41 = vld [vmem:[%s2 + $0x18] sm:$0xff]
    %v42 = vld [vmem:[%s2 + $0x20] sm:$0xff]
    %v43 = vld [vmem:[%s2 + $0x28] sm:$0xff]
    %v44 = vld [vmem:[%s2 + $0x30] sm:$0xff]
    %v45 = vld [vmem:[%s2 + $0x38] sm:$0xff]
    %v46 = vld [vmem:[%s2 + $0x40] sm:$0xff]
    %v47 = vld [vmem:[%s2 + $0x48] sm:$0xff]
    %v48 = vld [vmem:[%s2 + $0x50] sm:$0xff]
    %v49 = vld [vmem:[%s2 + $0x58] sm:$0xff]
    %v50 = vld [vmem:[%s2 + $0x60] sm:$0xff]
    %v51 = vld [vmem:[%s2 + $0x68] sm:$0xff]
    %v52 = vld [vmem:[%s2 + $0x70] sm:$0xff]
    %v53 = vld [vmem:[%s2 + $0x78] sm:$0xff]
    %v54 = vld [vmem:[%s3] sm:$0x1]
    %s55 = sld [smem:[#allocation2]]
    %v56 = vld [vmem:[%s0] sm:$0xf]
    %58 = vset.pattern.permute.xlu0 0
    %59 = vperm.xlu0 %58, %v38
    %v60 = vpop.permute.xlu0 %59
    %63 = vset.pattern.permute.xlu0 0
    %64 = vperm.xlu0 %63, %v39
    %v65 = vpop.permute.xlu0 %64
    %68 = vset.pattern.permute.xlu0 0
    %69 = vperm.xlu0 %68, %v40
    %v70 = vpop.permute.xlu0 %69
    %73 = vset.pattern.permute.xlu0 0
    %74 = vperm.xlu0 %73, %v41
    %v75 = vpop.permute.xlu0 %74
    %78 = vset.pattern.permute.xlu0 0
    %79 = vperm.xlu0 %78, %v42
    %v80 = vpop.permute.xlu0 %79
    %83 = vset.pattern.permute.xlu0 0
    %84 = vperm.xlu0 %83, %v43
    %v85 = vpop.permute.xlu0 %84
    %88 = vset.pattern.permute.xlu0 0
    %89 = vperm.xlu0 %88, %v44
    %v90 = vpop.permute.xlu0 %89
    %93 = vset.pattern.permute.xlu0 0
    %94 = vperm.xlu0 %93, %v45
    %v95 = vpop.permute.xlu0 %94
    %98 = vset.pattern.permute.xlu0 0
    %99 = vperm.xlu0 %98, %v46
    %v100 = vpop.permute.xlu0 %99
    %103 = vset.pattern.permute.xlu0 0
    %104 = vperm.xlu0 %103, %v47
    %v105 = vpop.permute.xlu0 %104
    %108 = vset.pattern.permute.xlu0 0
    %109 = vperm.xlu0 %108, %v48
    %v110 = vpop.permute.xlu0 %109
    %113 = vset.pattern.permute.xlu0 0
    %114 = vperm.xlu0 %113, %v49
    %v115 = vpop.permute.xlu0 %114
    %118 = vset.pattern.permute.xlu0 0
    %119 = vperm.xlu0 %118, %v50
    %v120 = vpop.permute.xlu0 %119
    %123 = vset.pattern.permute.xlu0 0
    %124 = vperm.xlu0 %123, %v51
    %v125 = vpop.permute.xlu0 %124
    %128 = vset.pattern.permute.xlu0 0
    %129 = vperm.xlu0 %128, %v52
    %v130 = vpop.permute.xlu0 %129
    %133 = vset.pattern.permute.xlu0 0
    %134 = vperm.xlu0 %133, %v53
    %v135 = vpop.permute.xlu0 %134
    %vm137 = vcmask 31744
    %v139 = vsel %vm137, %v22, 0
    %v142 = vsel %vm137, %v23, 0
    %v145 = vsel %vm137, %v24, 0
    %v148 = vsel %vm137, %v25, 0
    %v151 = vsel %vm137, %v26, 0
    %v154 = vsel %vm137, %v27, 0
    %v157 = vsel %vm137, %v28, 0
    %v160 = vsel %vm137, %v29, 0
    %v163 = vsel %vm137, %v30, 0
    %v166 = vsel %vm137, %v31, 0
    %v169 = vsel %vm137, %v32, 0
    %v172 = vsel %vm137, %v33, 0
    %v175 = vsel %vm137, %v34, 0
    %v178 = vsel %vm137, %v35, 0
    %v181 = vsel %vm137, %v36, 0
    %v184 = vsel %vm137, %v37, 0
    %vm186 = vcmask 1043456
    %v188 = vsel %vm186, %v56, 0
    %190 = vmatpush.msra.mxu0 0.0
    %191 = vmatpush.msra.mxu0 0.0
    %192 = vmatpush.msra.mxu0 0.0
    %193 = vmatpush.msra.mxu0 0.0
    %194 = vmatpush.msra.mxu0 0.0
    %195 = vmatpush.msra.mxu0 0.0
    %196 = vmatpush.msra.mxu0 0.0
    %197 = vmatpush.msra.mxu0 0.0
    %198 = vmatpush.msra.mxu0 0.0
    %199 = vmatpush.msra.mxu0 0.0
    %200 = vmatpush.msra.mxu0 0.0
    %201 = vmatpush.msra.mxu0 0.0
    %202 = vmatpush.msra.mxu0 0.0
    %203 = vmatpush.msra.mxu0 0.0
    %204 = vmatpush.msra.mxu0 0.0
    %205 = vmatpush.msra.mxu0 %v188
    %206 = vmatmul.f32.gmra.mxu0 %v139
    %v207 = vpop.f32.mrf.mxu0
    %v208 = vadd.f32 %v60, %v207
    %209 = vmatmul.f32.gmra.mxu0 %v142
    %v210 = vpop.f32.mrf.mxu0
    %v211 = vadd.f32 %v65, %v210
    %212 = vmatmul.f32.gmra.mxu0 %v145
    %v213 = vpop.f32.mrf.mxu0
    %v214 = vadd.f32 %v70, %v213
    %215 = vmatmul.f32.gmra.mxu0 %v148
    %v216 = vpop.f32.mrf.mxu0
    %v217 = vadd.f32 %v75, %v216
    %218 = vmatmul.f32.gmra.mxu0 %v151
    %v219 = vpop.f32.mrf.mxu0
    %v220 = vadd.f32 %v80, %v219
    %221 = vmatmul.f32.gmra.mxu0 %v154
    %v222 = vpop.f32.mrf.mxu0
    %v223 = vadd.f32 %v85, %v222
    %224 = vmatmul.f32.gmra.mxu0 %v157
    %v225 = vpop.f32.mrf.mxu0
    %v226 = vadd.f32 %v90, %v225
    %227 = vmatmul.f32.gmra.mxu0 %v160
    %v228 = vpop.f32.mrf.mxu0
    %v229 = vadd.f32 %v95, %v228
    %230 = vmatmul.f32.gmra.mxu0 %v163
    %v231 = vpop.f32.mrf.mxu0
    %v232 = vadd.f32 %v100, %v231
    %233 = vmatmul.f32.gmra.mxu0 %v166
    %v234 = vpop.f32.mrf.mxu0
    %v235 = vadd.f32 %v105, %v234
    %236 = vmatmul.f32.gmra.mxu0 %v169
    %v237 = vpop.f32.mrf.mxu0
    %v238 = vadd.f32 %v110, %v237
    %239 = vmatmul.f32.gmra.mxu0 %v172
    %v240 = vpop.f32.mrf.mxu0
    %v241 = vadd.f32 %v115, %v240
    %242 = vmatmul.f32.gmra.mxu0 %v175
    %v243 = vpop.f32.mrf.mxu0
    %v244 = vadd.f32 %v120, %v243
    %245 = vmatmul.f32.gmra.mxu0 %v178
    %v246 = vpop.f32.mrf.mxu0
    %v247 = vadd.f32 %v125, %v246
    %248 = vmatmul.f32.gmra.mxu0 %v181
    %v249 = vpop.f32.mrf.mxu0
    %v250 = vadd.f32 %v130, %v249
    %251 = vmatmul.f32.gmra.mxu0 %v184
    %v252 = vpop.f32.mrf.mxu0
    %v253 = vadd.f32 %v135, %v252
    %254 = vdwg.mxu0
    %v255 = vmax.f32 %v208, 0.0
    %v256 = vmax.f32 %v211, 0.0
    %v257 = vmax.f32 %v214, 0.0
    %v258 = vmax.f32 %v217, 0.0
    %v259 = vmax.f32 %v220, 0.0
    %v260 = vmax.f32 %v223, 0.0
    %v261 = vmax.f32 %v226, 0.0
    %v262 = vmax.f32 %v229, 0.0
    %v263 = vmax.f32 %v232, 0.0
    %v264 = vmax.f32 %v235, 0.0
    %v265 = vmax.f32 %v238, 0.0
    %v266 = vmax.f32 %v241, 0.0
    %v267 = vmax.f32 %v244, 0.0
    %v268 = vmax.f32 %v247, 0.0
    %v269 = vmax.f32 %v250, 0.0
    %v270 = vmax.f32 %v253, 0.0
    %v271 = vstv %s55
    %272 = vmatpush.msra.mxu0 %v270
    %273 = vmatpush.msra.mxu0 %v269
    %274 = vmatpush.msra.mxu0 %v268
    %275 = vmatpush.msra.mxu0 %v267
    %276 = vmatpush.msra.mxu0 %v266
    %277 = vmatpush.msra.mxu0 %v265
    %278 = vmatpush.msra.mxu0 %v264
    %279 = vmatpush.msra.mxu0 %v263
    %280 = vmatpush.msra.mxu0 %v262
    %281 = vmatpush.msra.mxu0 %v261
    %282 = vmatpush.msra.mxu0 %v260
    %283 = vmatpush.msra.mxu0 %v259
    %284 = vmatpush.msra.mxu0 %v258
    %285 = vmatpush.msra.mxu0 %v257
    %286 = vmatpush.msra.mxu0 %v256
    %287 = vmatpush.msra.mxu0 %v255
    %288 = vmatmul.f32.gmra.mxu0 %v54
    %v289 = vpop.f32.mrf.mxu0
    %v290 = vadd.f32 %v271, %v289
    %291 = vdwg.mxu0
    %v292 = vsub.f32 0.0, %v290
    %v293 = vmul.f32 %v292, 1.442695
    %v294 = vpow.pop %v293
    %v295 = vadd.f32 %v294, 1.0
    %v296 = vrcp.pop %v295
    %v297 = vmul.f32 %v295, %v296
    %v298 = vsub.f32 1.0, %v297
    %v299 = vmul.f32 %v296, %v298
    %v300 = vadd.f32 %v296, %v299
    %vm301 = vweird.f32 %v295
    %vm302 = vweird.f32 %v296
    %vm303 = vmor %vm301, %vm302
    %v304 = vsel %vm303, %v296, %v300
    %v305 = vand.u32 2147483647, %v295
    %vm306 = vcmp.eq.f32.partialorder %v305, 8.507059e+37
    %v307 = vand.u32 %v295, 2147483648
    %v308 = vor.u32 1.1754944e-38, %v307
    %v309 = vsel %vm306, %v308, %v304
    %v310 = vmul.f32 %v290, 1.442695
    %v311 = vpow.pop %v310
    %v312 = vadd.f32 %v311, 1.0
    %v313 = vrcp.pop %v312
    %v314 = vmul.f32 %v312, %v313
    %v315 = vsub.f32 1.0, %v314
    %v316 = vmul.f32 %v313, %v315
    %v317 = vadd.f32 %v313, %v316
    %vm318 = vweird.f32 %v312
    %vm319 = vweird.f32 %v313
    %vm320 = vmor %vm318, %vm319
    %v321 = vsel %vm320, %v313, %v317
    %v322 = vand.u32 2147483647, %v312
    %vm323 = vcmp.eq.f32.partialorder %v322, 8.507059e+37
    %v324 = vand.u32 %v312, 2147483648
    %v325 = vor.u32 1.1754944e-38, %v324
    %v326 = vsel %vm323, %v325, %v321
    %v328 = vrot.slane %v309, 7
    %vm330 = vcmask 1040384
    %v331 = vsel %vm330, %v326, %v328
    %332 = vst [vmem:[#allocation3] sm:$0x3] %v331
    // Predicated region
    $region22: #{tpu_custom_call.1} parent=1 // pred_check
      _
    $region23: #{tpu_custom_call.1} parent=1 // pred_check_branch
      %334 = sbr.rel (0) target = $region25
    $region24: #{tpu_custom_call.1} parent=1 // pred_region
      %336 = vsyncadd [#allocation4], 0
      %s338 = sshll.u32 [#allocation3], 4
      %s339 = int_to_ptr.vmem [resolvable:$true] %s338
      %s340 = sshll.u32 %s5, 4
      %s341 = int_to_ptr.hbm [resolvable:$true] %s340
      %343 = dma.vmem_to_hbm [thread:$0]  %s339, 32, %s341, [#allocation4]
    $region25: #{tpu_custom_call.1} parent=1 // pred_fallthru
      _
    // Predicated region
    $region26: #{tpu_custom_call.1} parent=1 // pred_check
      _
    $region27: #{tpu_custom_call.1} parent=1 // pred_check_branch
      %345 = sbr.rel (0) target = $region29
    $region28: #{tpu_custom_call.1} parent=1 // pred_region
      %347 = dma.done [#allocation4], 32
    $region29: #{tpu_custom_call.1} parent=1 // pred_fallthru
      _
    %348 = vsyncpa [#allocation4], 1

</llo_original>
